<compile_context>
chip_gen: v5e
topology: v5e:2x2
jax: 0.10.0
libtpu: 0.0.40
codegen_flags: <defaults>
</compile_context>

<pallas_src>
import functools

import jax
import jax.numpy as jnp
from jax import lax
from jax.experimental import pallas as pl
from jax.experimental.pallas import tpu as pltpu


_SUB = 512  # lane sub-tile processed per unrolled step inside the kernel


def _round_up(x, m):
    return (x + m - 1) // m * m


def _cdiv(a, b):
    return (a + b - 1) // b


def critic_kernel(s_ref, a_ref, w1s_ref, w1a_ref, b1_ref, w2_ref, b2_ref,
                  wq_ref, bq_ref, q_ref, *, sub, n_chunks):
    """One batch macro-tile.

    s_ref : [TB, s_dim]   state rows (batch on sublanes, features on lanes)
    a_ref : [TB, a_dim]   action rows
    w1s   : [fc1, s_dim]  fc1.weight[:, :s_dim]      b1_ref: [fc1, 1]
    w1a   : [fc1, a_dim]  fc1.weight[:, s_dim:]
    w2    : [fc2, fc1]    fc2.weight                 b2_ref: [fc2, 1]
    wq    : [fc2, 1]      q1.weight as a column      bq_ref: [1, 1]
    q_ref : [1, TB]       q values for this tile (batch on lanes -> lane-dense)
    """
    cdt = w1s_ref.dtype
    w1s = w1s_ref[...]
    w1a = w1a_ref[...]
    w2 = w2_ref[...]
    b1 = b1_ref[...]
    b2 = b2_ref[...]
    wq = wq_ref[...].astype(jnp.float32)
    bq = bq_ref[...]

    # Contract the trailing feature axis of W [out, feat] against the trailing
    # feature axis of the un-transposed activation rows [sub, feat]; the MXU
    # result lands directly in the transposed [out, sub] layout (batch on
    # lanes) without ever materializing x^T (or cat([s, a])) in HBM.
    dn = (((1,), (1,)), ((), ()))

    # Static unroll over lane sub-tiles: keeps per-chunk h1/h2 to ~16 f32 vregs
    # each (sub=512) so large macro-tiles amortize grid-step overhead without
    # spilling the 64-entry vreg file.  Slice bounds are static & 128-aligned.
    for c in range(n_chunks):
        lo = c * sub
        xs = s_ref[lo:lo + sub, :]                          # [sub, s_dim]
        xa = a_ref[lo:lo + sub, :]                          # [sub, a_dim]
        # fc1 (split-K across the concat boundary) + ReLU : [fc1, sub]
        h1 = lax.dot_general(w1s, xs, dn, preferred_element_type=jnp.float32)
        h1 = h1 + lax.dot_general(w1a, xa, dn,
                                  preferred_element_type=jnp.float32)
        h1 = jnp.maximum(h1 + b1, 0.0)
        # fc2 + ReLU : [fc2, sub]
        h2 = jnp.dot(w2, h1.astype(cdt), preferred_element_type=jnp.float32)
        h2 = jnp.maximum(h2 + b2, 0.0)
        # q head (single output unit): VPU multiply + sublane (XLU) reduction
        # instead of a wasteful 1-column MXU matmul; already lane-dense [1,sub].
        q = jnp.sum(h2 * wq, axis=0, keepdims=True) + bq
        q_ref[:, lo:lo + sub] = q.astype(q_ref.dtype)


def _choose_tiles(batch, block_b):
    """Pick (macro-tile TB, in-kernel lane sub-tile)."""
    cap = max(128, _round_up(block_b, 128))
    if cap > _SUB:
        cap = _round_up(cap, _SUB)
    # Keep >= 2 batch tiles whenever the batch allows it so both v7x
    # TensorCores get work on the "parallel" grid axis (free on v5e/v6e).
    target = _round_up(max(_cdiv(batch, 2), 1), 128)
    tb = min(cap, target)
    if tb > _SUB:
        tb = min(_round_up(tb, _SUB), cap)
    sub = min(tb, _SUB)
    return tb, sub


def critic_forward(state, action, params, *, block_b=2048,
                   compute_dtype=jnp.float32):
    """state: [B, input_dims], action: [B, n_actions] -> q: [B, 1] (float32).

    compute_dtype=jnp.bfloat16 halves the activation/weight DMA bytes
    (recommended on v6e/v7x, also safe on v5e); accumulation stays float32.
    """
    w1, b1, w2, b2, wq, bq = params        # torch layouts: w1 [fc1, in+act], ...
    B, s_dim = state.shape
    a_dim = action.shape[1]
    fc1, in_dim = w1.shape
    fc2 = w2.shape[0]
    assert in_dim == s_dim + a_dim

    tb, sub = _choose_tiles(B, block_b)
    n_chunks = tb // sub
    grid_b = _cdiv(B, tb)
    b_pad = grid_b * tb                    # output padded at allocation only

    # No wrapper-side concat / transpose / pad of the activations.  Cast only
    # if the caller asked for a narrower compute dtype (no-op on the f32 path;
    # in a real SAC loop the replay buffer would already hold bf16).
    if state.dtype != compute_dtype:
        state = state.astype(compute_dtype)
    if action.dtype != compute_dtype:
        action = action.astype(compute_dtype)

    # Weight-side prep is a few KB, done once -- not on the activation path.
    w1s = w1[:, :s_dim].astype(compute_dtype)
    w1a = w1[:, s_dim:].astype(compute_dtype)
    w2c = w2.astype(compute_dtype)
    wqc = wq.reshape(fc2, 1).astype(compute_dtype)
    b1c = b1.reshape(fc1, 1).astype(jnp.float32)
    b2c = b2.reshape(fc2, 1).astype(jnp.float32)
    bqc = bq.reshape(1, 1).astype(jnp.float32)

    def resident(shape):
        # constant block index -> stays VMEM-resident across the whole grid
        return pl.BlockSpec(shape, lambda i: (0, 0))

    def act_spec(dim):
        # Deepen the input pipeline when there are enough tiles to benefit;
        # the per-step DMA is tens of KB, i.e. latency- not bandwidth-bound.
        if grid_b >= 3:
            return pl.BlockSpec((tb, dim), lambda i: (i, 0),
                                pipeline_mode=pl.Buffered(3))
        return pl.BlockSpec((tb, dim), lambda i: (i, 0))

    kernel = functools.partial(critic_kernel, sub=sub, n_chunks=n_chunks)

    q_rows = pl.pallas_call(
        kernel,
        out_shape=jax.ShapeDtypeStruct((1, b_pad), jnp.float32),
        grid=(grid_b,),
        in_specs=[
            act_spec(s_dim),                 # state rows tile
            act_spec(a_dim),                 # action rows tile
            resident((fc1, s_dim)),          # fc1.weight (state half)
            resident((fc1, a_dim)),          # fc1.weight (action half)
            resident((fc1, 1)),              # fc1.bias
            resident((fc2, fc1)),            # fc2.weight
            resident((fc2, 1)),              # fc2.bias
            resident((fc2, 1)),              # q1.weight (column)
            resident((1, 1)),                # q1.bias
        ],
        out_specs=pl.BlockSpec((1, tb), lambda i: (0, i)),
        compiler_params=pltpu.CompilerParams(
            dimension_semantics=("parallel",),   # megacore-shard batch tiles
        ),
    )(state, action, w1s, w1a, b1c, w2c, b2c, wqc, bqc)

    # Lanes >= B were computed from boundary-padded (garbage) input rows;
    # slice them off before anything consumes the result.
    return q_rows[0, :B].reshape(B, 1)


def init_params(key, input_dims, n_actions, fc1_dims, fc2_dims):
    """PyTorch nn.Linear default init (uniform +-1/sqrt(fan_in)), torch layouts."""
    def linear(k, fan_in, fan_out):
        kw, kb = jax.random.split(k)
        bound = 1.0 / float(jnp.sqrt(jnp.float32(fan_in)))
        w = jax.random.uniform(kw, (fan_out, fan_in), jnp.float32, -bound, bound)
        b = jax.random.uniform(kb, (fan_out,), jnp.float32, -bound, bound)
        return w, b

    k1, k2, k3 = jax.random.split(key, 3)
    w1, b1 = linear(k1, input_dims + n_actions, fc1_dims)
    w2, b2 = linear(k2, fc1_dims, fc2_dims)
    wq, bq = linear(k3, fc2_dims, 1)
    return (w1, b1, w2, b2, wq, bq)


def critic_reference(state, action, params):
    """Pure-JAX replica of the PyTorch forward."""
    w1, b1, w2, b2, wq, bq = params
    x = jnp.concatenate([state, action], axis=1)
    h = jnp.maximum(x @ w1.T + b1, 0.0)
    h = jnp.maximum(h @ w2.T + b2, 0.0)
    return h @ wq.T + bq


if __name__ == "__main__":
    # small shapes consistent with the module's forward
    batch = 8
    input_dims = 8       # input_dims[0] in the torch module
    n_actions = 4
    fc1_dims = 32
    fc2_dims = 32

    key = jax.random.PRNGKey(0)
    k_state, k_action, k_params, k_big, k_huge = jax.random.split(key, 5)

    state = jax.random.normal(k_state, (batch, input_dims), jnp.float32)
    action = jax.random.normal(k_action, (batch, n_actions), jnp.float32)
    params = init_params(k_params, input_dims, n_actions, fc1_dims, fc2_dims)

    # Small batch, f32: single 128-wide tile with row-boundary masking.
    q = jax.block_until_ready(critic_forward(state, action, params))
    q_ref = critic_reference(state, action, params)
    assert q.shape == (batch, 1)
    assert jnp.allclose(q, q_ref, atol=2e-5, rtol=2e-5)

    # Multi-tile grid + partial last tile (B=300 -> two 256-wide tiles).
    big_b = 300
    ks, ka = jax.random.split(k_big)
    state_b = jax.random.normal(ks, (big_b, input_dims), jnp.float32)
    action_b = jax.random.normal(ka, (big_b, n_actions), jnp.float32)
    q_b = jax.block_until_ready(critic_forward(state_b, action_b, params))
    assert q_b.shape == (big_b, 1)
    assert jnp.allclose(q_b, critic_reference(state_b, action_b, params),
                        atol=2e-5, rtol=2e-5)

    # >= 3 tiles: exercises the Buffered(3) input pipeline; plus the bf16
    # compute path (f32 accumulation) with a correspondingly loose tolerance.
    n3 = 1536
    ks3, ka3 = jax.random.split(k_huge)
    state_3 = jax.random.normal(ks3, (n3, input_dims), jnp.float32)
    action_3 = jax.random.normal(ka3, (n3, n_actions), jnp.float32)
    q3_ref = critic_reference(state_3, action_3, params)
    q_3 = jax.block_until_ready(
        critic_forward(state_3, action_3, params, block_b=512))
    assert q_3.shape == (n3, 1)
    assert jnp.allclose(q_3, q3_ref, atol=2e-5, rtol=2e-5)
    q_3_bf16 = jax.block_until_ready(
        critic_forward(state_3, action_3, params, block_b=512,
                       compute_dtype=jnp.bfloat16))
    assert jnp.allclose(q_3_bf16, q3_ref, atol=5e-2, rtol=5e-2)

    print("KERNEL_OK")
</pallas_src>

<mosaic_0001>
module attributes {stable_mosaic.version = 11 : i64} {
  func.func @critic_kernel(%arg0: i32, %arg1: memref<128x8xf32, #tpu.memory_space<vmem>>, %arg2: memref<128x4xf32, #tpu.memory_space<vmem>>, %arg3: memref<32x8xf32, #tpu.memory_space<vmem>>, %arg4: memref<32x4xf32, #tpu.memory_space<vmem>>, %arg5: memref<32x1xf32, #tpu.memory_space<vmem>>, %arg6: memref<32x32xf32, #tpu.memory_space<vmem>>, %arg7: memref<32x1xf32, #tpu.memory_space<vmem>>, %arg8: memref<32x1xf32, #tpu.memory_space<vmem>>, %arg9: memref<1x1xf32, #tpu.memory_space<vmem>>, %arg10: memref<1x128xf32, #tpu.memory_space<vmem>>) attributes {dimension_semantics = [#tpu.dimension_semantics<parallel>], iteration_bounds = array<i64: 1>, scalar_prefetch = 0 : i64, scratch_operands = 0 : i64, tpu.core_type = #tpu.core_type<tc>, window_params = [{transform_indices = @transform_0, window_bounds = array<i64: 128, 8>}, {transform_indices = @transform_1, window_bounds = array<i64: 128, 4>}, {pipeline_mode = #tpu.pipeline_mode<synchronous>, transform_indices = @transform_2, window_bounds = array<i64: 32, 8>}, {pipeline_mode = #tpu.pipeline_mode<synchronous>, transform_indices = @transform_3, window_bounds = array<i64: 32, 4>}, {pipeline_mode = #tpu.pipeline_mode<synchronous>, transform_indices = @transform_4, window_bounds = array<i64: 32, 1>}, {pipeline_mode = #tpu.pipeline_mode<synchronous>, transform_indices = @transform_5, window_bounds = array<i64: 32, 32>}, {pipeline_mode = #tpu.pipeline_mode<synchronous>, transform_indices = @transform_6, window_bounds = array<i64: 32, 1>}, {pipeline_mode = #tpu.pipeline_mode<synchronous>, transform_indices = @transform_7, window_bounds = array<i64: 32, 1>}, {pipeline_mode = #tpu.pipeline_mode<synchronous>, transform_indices = @transform_8, window_bounds = array<i64: 1, 1>}, {transform_indices = @transform_9, window_bounds = array<i64: 1, 128>}]} {
    %c0 = arith.constant 0 : index
    %c0_0 = arith.constant 0 : index
    %0 = vector.load %arg3[%c0, %c0_0] : memref<32x8xf32, #tpu.memory_space<vmem>>, vector<32x8xf32>
    %c0_1 = arith.constant 0 : index
    %c0_2 = arith.constant 0 : index
    %1 = vector.load %arg4[%c0_1, %c0_2] : memref<32x4xf32, #tpu.memory_space<vmem>>, vector<32x4xf32>
    %c0_3 = arith.constant 0 : index
    %c0_4 = arith.constant 0 : index
    %2 = vector.load %arg6[%c0_3, %c0_4] : memref<32x32xf32, #tpu.memory_space<vmem>>, vector<32x32xf32>
    %c0_5 = arith.constant 0 : index
    %c0_6 = arith.constant 0 : index
    %3 = vector.load %arg5[%c0_5, %c0_6] : memref<32x1xf32, #tpu.memory_space<vmem>>, vector<32x1xf32>
    %c0_7 = arith.constant 0 : index
    %c0_8 = arith.constant 0 : index
    %4 = vector.load %arg7[%c0_7, %c0_8] : memref<32x1xf32, #tpu.memory_space<vmem>>, vector<32x1xf32>
    %c0_9 = arith.constant 0 : index
    %c0_10 = arith.constant 0 : index
    %5 = vector.load %arg8[%c0_9, %c0_10] : memref<32x1xf32, #tpu.memory_space<vmem>>, vector<32x1xf32>
    %c0_11 = arith.constant 0 : index
    %c0_12 = arith.constant 0 : index
    %6 = vector.load %arg9[%c0_11, %c0_12] : memref<1x1xf32, #tpu.memory_space<vmem>>, vector<1x1xf32>
    %c0_13 = arith.constant 0 : index
    %c0_14 = arith.constant 0 : index
    %7 = vector.load %arg1[%c0_13, %c0_14] : memref<128x8xf32, #tpu.memory_space<vmem>>, vector<128x8xf32>
    %c0_15 = arith.constant 0 : index
    %c0_16 = arith.constant 0 : index
    %8 = vector.load %arg2[%c0_15, %c0_16] : memref<128x4xf32, #tpu.memory_space<vmem>>, vector<128x4xf32>
    %cst = arith.constant dense<0.000000e+00> : vector<32x128xf32>
    %9 = tpu.matmul %0, %7, %cst {dimension_numbers = #tpu.dot_dimension_numbers<[1], [1], [0], [0], [0, 0, 1, 0], [], []>} : vector<32x8xf32>, vector<128x8xf32>, vector<32x128xf32> -> vector<32x128xf32>
    %cst_17 = arith.constant dense<0.000000e+00> : vector<32x128xf32>
    %10 = tpu.matmul %1, %8, %cst_17 {dimension_numbers = #tpu.dot_dimension_numbers<[1], [1], [0], [0], [0, 0, 1, 0], [], []>} : vector<32x4xf32>, vector<128x4xf32>, vector<32x128xf32> -> vector<32x128xf32>
    %11 = arith.addf %9, %10 : vector<32x128xf32>
    %12 = vector.broadcast %3 : vector<32x1xf32> to vector<32x128xf32>
    %13 = arith.addf %11, %12 : vector<32x128xf32>
    %cst_18 = arith.constant 0.000000e+00 : f32
    %14 = vector.broadcast %cst_18 : f32 to vector<32x128xf32>
    %15 = arith.maximumf %13, %14 : vector<32x128xf32>
    %cst_19 = arith.constant dense<0.000000e+00> : vector<32x128xf32>
    %16 = tpu.matmul %2, %15, %cst_19 {dimension_numbers = #tpu.dot_dimension_numbers<[1], [0], [0], [1], [0, 0, 1, 1], [], []>} : vector<32x32xf32>, vector<32x128xf32>, vector<32x128xf32> -> vector<32x128xf32>
    %17 = vector.broadcast %4 : vector<32x1xf32> to vector<32x128xf32>
    %18 = arith.addf %16, %17 : vector<32x128xf32>
    %cst_20 = arith.constant 0.000000e+00 : f32
    %19 = vector.broadcast %cst_20 : f32 to vector<32x128xf32>
    %20 = arith.maximumf %18, %19 : vector<32x128xf32>
    %21 = vector.broadcast %5 : vector<32x1xf32> to vector<32x128xf32>
    %22 = arith.mulf %20, %21 : vector<32x128xf32>
    %cst_21 = arith.constant dense<0.000000e+00> : vector<128xf32>
    %23 = vector.multi_reduction <add>, %22, %cst_21 [0] : vector<32x128xf32> to vector<128xf32>
    %24 = vector.shape_cast %23 : vector<128xf32> to vector<1x128xf32>
    %25 = vector.broadcast %6 : vector<1x1xf32> to vector<1x128xf32>
    %26 = arith.addf %24, %25 : vector<1x128xf32>
    %c0_22 = arith.constant 0 : index
    %c0_23 = arith.constant 0 : index
    %27 = vector.load %arg10[%c0_22, %c0_23] : memref<1x128xf32, #tpu.memory_space<vmem>>, vector<1x128xf32>
    tpu.vector_store %arg10[%c0_22, %c0_23], %26 {strides = array<i32>} : memref<1x128xf32, #tpu.memory_space<vmem>>, vector<1x128xf32>,
    return
  }
  func.func @transform_0(%arg0: i32) -> (i32, i32) {
    %c0_i32 = arith.constant 0 : i32
    %c0_i32_0 = arith.constant 0 : i32
    return %arg0, %c0_i32 : i32, i32
  }
  func.func @transform_1(%arg0: i32) -> (i32, i32) {
    %c0_i32 = arith.constant 0 : i32
    %c0_i32_0 = arith.constant 0 : i32
    return %arg0, %c0_i32 : i32, i32
  }
  func.func @transform_2(%arg0: i32) -> (i32, i32) {
    %c0_i32 = arith.constant 0 : i32
    %c0_i32_0 = arith.constant 0 : i32
    %c0_i32_1 = arith.constant 0 : i32
    return %c0_i32, %c0_i32_0 : i32, i32
  }
  func.func @transform_3(%arg0: i32) -> (i32, i32) {
    %c0_i32 = arith.constant 0 : i32
    %c0_i32_0 = arith.constant 0 : i32
    %c0_i32_1 = arith.constant 0 : i32
    return %c0_i32, %c0_i32_0 : i32, i32
  }
  func.func @transform_4(%arg0: i32) -> (i32, i32) {
    %c0_i32 = arith.constant 0 : i32
    %c0_i32_0 = arith.constant 0 : i32
    %c0_i32_1 = arith.constant 0 : i32
    return %c0_i32, %c0_i32_0 : i32, i32
  }
  func.func @transform_5(%arg0: i32) -> (i32, i32) {
    %c0_i32 = arith.constant 0 : i32
    %c0_i32_0 = arith.constant 0 : i32
    %c0_i32_1 = arith.constant 0 : i32
    return %c0_i32, %c0_i32_0 : i32, i32
  }
  func.func @transform_6(%arg0: i32) -> (i32, i32) {
    %c0_i32 = arith.constant 0 : i32
    %c0_i32_0 = arith.constant 0 : i32
    %c0_i32_1 = arith.constant 0 : i32
    return %c0_i32, %c0_i32_0 : i32, i32
  }
  func.func @transform_7(%arg0: i32) -> (i32, i32) {
    %c0_i32 = arith.constant 0 : i32
    %c0_i32_0 = arith.constant 0 : i32
    %c0_i32_1 = arith.constant 0 : i32
    return %c0_i32, %c0_i32_0 : i32, i32
  }
  func.func @transform_8(%arg0: i32) -> (i32, i32) {
    %c0_i32 = arith.constant 0 : i32
    %c0_i32_0 = arith.constant 0 : i32
    %c0_i32_1 = arith.constant 0 : i32
    return %c0_i32, %c0_i32_0 : i32, i32
  }
  func.func @transform_9(%arg0: i32) -> (i32, i32) {
    %c0_i32 = arith.constant 0 : i32
    %c0_i32_0 = arith.constant 0 : i32
    return %c0_i32, %arg0 : i32, i32
  }
}

</mosaic_0001>

<llo_original>
// kernel: tpu_custom_call.1
$region0: #{tpu_custom_call.1}
  #allocation0 [shape = 'u32[]', space=smem, size = 0x4, offset = 0x4, fixed_abs, tag = 'smem constant byte address 0x4 - core index']
  #allocation1 [shape = 'u32[72,128]{1,0:T(1,128)}', space=vmem, size = 0x9000, scoped, tag = 'internal scratch']
  #allocation2 [shape = 'f32[1,1]{1,0:T(1,128)S(1)}', space=vmem, size = 0x200, scoped, tag = 'scoped memory for tpu_custom_call.1']
  %s0 = inlined_call_operand.vmem [shape: f32[8,8], index: 0, kind: input, shape index: {}]
  %s1 = inlined_call_operand.vmem [shape: f32[8,4], index: 1, kind: input, shape index: {}]
  %s2 = inlined_call_operand.vmem [shape: f32[32,8], index: 2, kind: input, shape index: {}]
  %s3 = inlined_call_operand.vmem [shape: f32[32,4], index: 3, kind: input, shape index: {}]
  %s4 = inlined_call_operand.vmem [shape: f32[32,1], index: 4, kind: input, shape index: {}]
  %s5 = inlined_call_operand.vmem [shape: f32[32,32], index: 5, kind: input, shape index: {}]
  %s6 = inlined_call_operand.vmem [shape: f32[32,1], index: 6, kind: input, shape index: {}]
  %s7 = inlined_call_operand.vmem [shape: f32[32,1], index: 7, kind: input, shape index: {}]
  %s8 = inlined_call_operand.<no memory space> [shape: f32[1,1], index: 8, kind: input, shape index: {}]
  %s9 = inlined_call_operand.hbm [shape: f32[1,128], index: 9, kind: output, shape index: {}]
  %s10 = sld [smem:[#allocation0]]
  $region46: #{tpu_custom_call.1} parent=0
    _
  %s12 = ssub.s32 1, %s10
  %s13 = scalar_select 0, %s12, %s10
  %v14 = vstv %s8
  %15 = vst [vmem:[#allocation2] sm:$0x1] %v14
  $region1: #{tpu_custom_call.1} parent=0
    #allocation3 [shape = 'u8[512]{0}', space=vmem, size = 0x400, scoped, tag = 'output window, operand 0, single buffered']
    #allocation4 [shape = 's32[1]{0}', space=sflag, size = 0x4, scoped, tag = 'scoped memory for tpu_custom_call.1']
    %16 = vsyncpa [#allocation4], 0
    // Predicated region
    $region2: #{tpu_custom_call.1} parent=1 // pred_check
      _
    $region3: #{tpu_custom_call.1} parent=1 // pred_check_branch
      %18 = sbr.rel (0) target = $region5
    $region4: #{tpu_custom_call.1} parent=1 // pred_region
      _
    $region5: #{tpu_custom_call.1} parent=1 // pred_fallthru
      _
    // Predicated region
    $region6: #{tpu_custom_call.1} parent=1 // pred_check
      _
    $region7: #{tpu_custom_call.1} parent=1 // pred_check_branch
      %20 = sbr.rel (0) target = $region9
    $region8: #{tpu_custom_call.1} parent=1 // pred_region
      _
    $region9: #{tpu_custom_call.1} parent=1 // pred_fallthru
      _
    // Predicated region
    $region10: #{tpu_custom_call.1} parent=1 // pred_check
      _
    $region11: #{tpu_custom_call.1} parent=1 // pred_check_branch
      %22 = sbr.rel (0) target = $region13
    $region12: #{tpu_custom_call.1} parent=1 // pred_region
      _
    $region13: #{tpu_custom_call.1} parent=1 // pred_fallthru
      _
    // Predicated region
    $region14: #{tpu_custom_call.1} parent=1 // pred_check
      _
    $region15: #{tpu_custom_call.1} parent=1 // pred_check_branch
      %24 = sbr.rel (0) target = $region17
    $region16: #{tpu_custom_call.1} parent=1 // pred_region
      _
    $region17: #{tpu_custom_call.1} parent=1 // pred_fallthru
      _
    // Predicated region
    $region18: #{tpu_custom_call.1} parent=1 // pred_check
      _
    $region19: #{tpu_custom_call.1} parent=1 // pred_check_branch
      %26 = sbr.rel (0) target = $region21
    $region20: #{tpu_custom_call.1} parent=1 // pred_region
      _
    $region21: #{tpu_custom_call.1} parent=1 // pred_fallthru
      _
    // Predicated region
    $region22: #{tpu_custom_call.1} parent=1 // pred_check
      _
    $region23: #{tpu_custom_call.1} parent=1 // pred_check_branch
      %28 = sbr.rel (0) target = $region25
    $region24: #{tpu_custom_call.1} parent=1 // pred_region
      _
    $region25: #{tpu_custom_call.1} parent=1 // pred_fallthru
      _
    // Predicated region
    $region26: #{tpu_custom_call.1} parent=1 // pred_check
      _
    $region27: #{tpu_custom_call.1} parent=1 // pred_check_branch
      %30 = sbr.rel (0) target = $region29
    $region28: #{tpu_custom_call.1} parent=1 // pred_region
      _
    $region29: #{tpu_custom_call.1} parent=1 // pred_fallthru
      _
    // Predicated region
    $region30: #{tpu_custom_call.1} parent=1 // pred_check
      _
    $region31: #{tpu_custom_call.1} parent=1 // pred_check_branch
      %32 = sbr.rel (0) target = $region33
    $region32: #{tpu_custom_call.1} parent=1 // pred_region
      _
    $region33: #{tpu_custom_call.1} parent=1 // pred_fallthru
      _
    // Predicated region
    $region34: #{tpu_custom_call.1} parent=1 // pred_check
      _
    $region35: #{tpu_custom_call.1} parent=1 // pred_check_branch
      %34 = sbr.rel (0) target = $region37
    $region36: #{tpu_custom_call.1} parent=1 // pred_region
      _
    $region37: #{tpu_custom_call.1} parent=1 // pred_fallthru
      _
    %v35 = vld [vmem:[%s2] sm:$0xff]
    %v36 = vld [vmem:[%s2 + $0x8] sm:$0xff]
    %v37 = vld [vmem:[%s2 + $0x10] sm:$0xff]
    %v38 = vld [vmem:[%s2 + $0x18] sm:$0xff]
    %v39 = vld [vmem:[%s3] sm:$0xff]
    %v40 = vld [vmem:[%s3 + $0x8] sm:$0xff]
    %v41 = vld [vmem:[%s3 + $0x10] sm:$0xff]
    %v42 = vld [vmem:[%s3 + $0x18] sm:$0xff]
    %v43 = vld [vmem:[%s5] sm:$0xff]
    %v44 = vld [vmem:[%s5 + $0x8] sm:$0xff]
    %v45 = vld [vmem:[%s5 + $0x10] sm:$0xff]
    %v46 = vld [vmem:[%s5 + $0x18] sm:$0xff]
    %v47 = vld [vmem:[%s4] sm:$0xff]
    %v48 = vld [vmem:[%s4 + $0x8] sm:$0xff]
    %v49 = vld [vmem:[%s4 + $0x10] sm:$0xff]
    %v50 = vld [vmem:[%s4 + $0x18] sm:$0xff]
    %v51 = vld [vmem:[%s6] sm:$0xff]
    %v52 = vld [vmem:[%s6 + $0x8] sm:$0xff]
    %v53 = vld [vmem:[%s6 + $0x10] sm:$0xff]
    %v54 = vld [vmem:[%s6 + $0x18] sm:$0xff]
    %v55 = vld [vmem:[%s7] sm:$0xff]
    %v56 = vld [vmem:[%s7 + $0x8] sm:$0xff]
    %v57 = vld [vmem:[%s7 + $0x10] sm:$0xff]
    %v58 = vld [vmem:[%s7 + $0x18] sm:$0xff]
    %v59 = vld [vmem:[#allocation2] sm:$0x1]
    %v60 = vld [vmem:[%s0] sm:$0xff]
    %v61 = vld [vmem:[%s0 + $0x8] sm:$0xff]
    %v62 = vld [vmem:[%s0 + $0x10] sm:$0xff]
    %v63 = vld [vmem:[%s0 + $0x18] sm:$0xff]
    %v64 = vld [vmem:[%s0 + $0x20] sm:$0xff]
    %v65 = vld [vmem:[%s0 + $0x28] sm:$0xff]
    %v66 = vld [vmem:[%s0 + $0x30] sm:$0xff]
    %v67 = vld [vmem:[%s0 + $0x38] sm:$0xff]
    %v68 = vld [vmem:[%s0 + $0x40] sm:$0xff]
    %v69 = vld [vmem:[%s0 + $0x48] sm:$0xff]
    %v70 = vld [vmem:[%s0 + $0x50] sm:$0xff]
    %v71 = vld [vmem:[%s0 + $0x58] sm:$0xff]
    %v72 = vld [vmem:[%s0 + $0x60] sm:$0xff]
    %v73 = vld [vmem:[%s0 + $0x68] sm:$0xff]
    %v74 = vld [vmem:[%s0 + $0x70] sm:$0xff]
    %v75 = vld [vmem:[%s0 + $0x78] sm:$0xff]
    %v76 = vld [vmem:[%s1] sm:$0xff]
    %v77 = vld [vmem:[%s1 + $0x8] sm:$0xff]
    %v78 = vld [vmem:[%s1 + $0x10] sm:$0xff]
    %v79 = vld [vmem:[%s1 + $0x18] sm:$0xff]
    %v80 = vld [vmem:[%s1 + $0x20] sm:$0xff]
    %v81 = vld [vmem:[%s1 + $0x28] sm:$0xff]
    %v82 = vld [vmem:[%s1 + $0x30] sm:$0xff]
    %v83 = vld [vmem:[%s1 + $0x38] sm:$0xff]
    %v84 = vld [vmem:[%s1 + $0x40] sm:$0xff]
    %v85 = vld [vmem:[%s1 + $0x48] sm:$0xff]
    %v86 = vld [vmem:[%s1 + $0x50] sm:$0xff]
    %v87 = vld [vmem:[%s1 + $0x58] sm:$0xff]
    %v88 = vld [vmem:[%s1 + $0x60] sm:$0xff]
    %v89 = vld [vmem:[%s1 + $0x68] sm:$0xff]
    %v90 = vld [vmem:[%s1 + $0x70] sm:$0xff]
    %v91 = vld [vmem:[%s1 + $0x78] sm:$0xff]
    %vm92 = vcmask 31744
    %v94 = vsel %vm92, %v39, 0
    %v97 = vsel %vm92, %v40, 0
    %v100 = vsel %vm92, %v41, 0
    %v103 = vsel %vm92, %v42, 0
    %v106 = vsel %vm92, %v76, 0
    %v109 = vsel %vm92, %v77, 0
    %v112 = vsel %vm92, %v78, 0
    %v115 = vsel %vm92, %v79, 0
    %v118 = vsel %vm92, %v80, 0
    %v121 = vsel %vm92, %v81, 0
    %v124 = vsel %vm92, %v82, 0
    %v127 = vsel %vm92, %v83, 0
    %v130 = vsel %vm92, %v84, 0
    %v133 = vsel %vm92, %v85, 0
    %v136 = vsel %vm92, %v86, 0
    %v139 = vsel %vm92, %v87, 0
    %v142 = vsel %vm92, %v88, 0
    %v145 = vsel %vm92, %v89, 0
    %v148 = vsel %vm92, %v90, 0
    %v151 = vsel %vm92, %v91, 0
    %153 = vmatpush.xpose.msra.mxu0 %v151
    %154 = vmatpush.xpose.msra.mxu0 %v148
    %155 = vmatpush.xpose.msra.mxu0 %v145
    %156 = vmatpush.xpose.msra.mxu0 %v142
    %157 = vmatpush.xpose.msra.mxu0 %v139
    %158 = vmatpush.xpose.msra.mxu0 %v136
    %159 = vmatpush.xpose.msra.mxu0 %v133
    %160 = vmatpush.xpose.msra.mxu0 %v130
    %161 = vmatpush.xpose.msra.mxu0 %v127
    %162 = vmatpush.xpose.msra.mxu0 %v124
    %163 = vmatpush.xpose.msra.mxu0 %v121
    %164 = vmatpush.xpose.msra.mxu0 %v118
    %165 = vmatpush.xpose.msra.mxu0 %v115
    %166 = vmatpush.xpose.msra.mxu0 %v112
    %167 = vmatpush.xpose.msra.mxu0 %v109
    %168 = vmatpush.xpose.msra.mxu0 %v106
    %169 = vmatmul.f32.gmra.mxu0 %v94
    %v170 = vpop.f32.mrf.mxu0
    %v171 = vadd.f32 0.0, %v170
    %172 = vmatmul.f32.gmra.mxu0 %v97
    %v173 = vpop.f32.mrf.mxu0
    %v174 = vadd.f32 0.0, %v173
    %175 = vmatmul.f32.gmra.mxu0 %v100
    %v176 = vpop.f32.mrf.mxu0
    %v177 = vadd.f32 0.0, %v176
    %178 = vmatmul.f32.gmra.mxu0 %v103
    %v179 = vpop.f32.mrf.mxu0
    %v180 = vadd.f32 0.0, %v179
    %181 = vdwg.mxu0
    %vm182 = vcmask 64512
    %v184 = vsel %vm182, %v35, 0
    %v187 = vsel %vm182, %v36, 0
    %v190 = vsel %vm182, %v37, 0
    %v193 = vsel %vm182, %v38, 0
    %v196 = vsel %vm182, %v60, 0
    %v199 = vsel %vm182, %v61, 0
    %v202 = vsel %vm182, %v62, 0
    %v205 = vsel %vm182, %v63, 0
    %v208 = vsel %vm182, %v64, 0
    %v211 = vsel %vm182, %v65, 0
    %v214 = vsel %vm182, %v66, 0
    %v217 = vsel %vm182, %v67, 0
    %v220 = vsel %vm182, %v68, 0
    %v223 = vsel %vm182, %v69, 0
    %v226 = vsel %vm182, %v70, 0
    %v229 = vsel %vm182, %v71, 0
    %v232 = vsel %vm182, %v72, 0
    %v235 = vsel %vm182, %v73, 0
    %v238 = vsel %vm182, %v74, 0
    %v241 = vsel %vm182, %v75, 0
    %243 = vmatpush.xpose.msra.mxu0 %v241
    %244 = vmatpush.xpose.msra.mxu0 %v238
    %245 = vmatpush.xpose.msra.mxu0 %v235
    %246 = vmatpush.xpose.msra.mxu0 %v232
    %247 = vmatpush.xpose.msra.mxu0 %v229
    %248 = vmatpush.xpose.msra.mxu0 %v226
    %249 = vmatpush.xpose.msra.mxu0 %v223
    %250 = vmatpush.xpose.msra.mxu0 %v220
    %251 = vmatpush.xpose.msra.mxu0 %v217
    %252 = vmatpush.xpose.msra.mxu0 %v214
    %253 = vmatpush.xpose.msra.mxu0 %v211
    %254 = vmatpush.xpose.msra.mxu0 %v208
    %255 = vmatpush.xpose.msra.mxu0 %v205
    %256 = vmatpush.xpose.msra.mxu0 %v202
    %257 = vmatpush.xpose.msra.mxu0 %v199
    %258 = vmatpush.xpose.msra.mxu0 %v196
    %259 = vmatmul.f32.gmra.mxu0 %v184
    %v260 = vpop.f32.mrf.mxu0
    %v261 = vadd.f32 %v171, %v260
    %262 = vmatmul.f32.gmra.mxu0 %v187
    %v263 = vpop.f32.mrf.mxu0
    %v264 = vadd.f32 %v174, %v263
    %265 = vmatmul.f32.gmra.mxu0 %v190
    %v266 = vpop.f32.mrf.mxu0
    %v267 = vadd.f32 %v177, %v266
    %268 = vmatmul.f32.gmra.mxu0 %v193
    %v269 = vpop.f32.mrf.mxu0
    %v270 = vadd.f32 %v180, %v269
    %271 = vdwg.mxu0
    %273 = vset.pattern.permute.xlu0 0
    %274 = vperm.xlu0 %273, %v47
    %v275 = vpop.permute.xlu0 %274
    %278 = vset.pattern.permute.xlu0 0
    %279 = vperm.xlu0 %278, %v48
    %v280 = vpop.permute.xlu0 %279
    %283 = vset.pattern.permute.xlu0 0
    %284 = vperm.xlu0 %283, %v49
    %v285 = vpop.permute.xlu0 %284
    %288 = vset.pattern.permute.xlu0 0
    %289 = vperm.xlu0 %288, %v50
    %v290 = vpop.permute.xlu0 %289
    %v292 = vadd.f32 %v261, %v275
    %v293 = vadd.f32 %v264, %v280
    %v294 = vadd.f32 %v267, %v285
    %v295 = vadd.f32 %v270, %v290
    %v296 = vmax.f32 %v292, 0.0
    %v297 = vmax.f32 %v293, 0.0
    %v298 = vmax.f32 %v294, 0.0
    %v299 = vmax.f32 %v295, 0.0
    %301 = vset.pattern.permute.xlu0 0
    %302 = vperm.xlu0 %301, %v51
    %v303 = vpop.permute.xlu0 %302
    %306 = vset.pattern.permute.xlu0 0
    %307 = vperm.xlu0 %306, %v52
    %v308 = vpop.permute.xlu0 %307
    %311 = vset.pattern.permute.xlu0 0
    %312 = vperm.xlu0 %311, %v53
    %v313 = vpop.permute.xlu0 %312
    %316 = vset.pattern.permute.xlu0 0
    %317 = vperm.xlu0 %316, %v54
    %v318 = vpop.permute.xlu0 %317
    %vm320 = vcmask 261120
    %v322 = vsel %vm320, %v43, 0
    %v325 = vsel %vm320, %v44, 0
    %v328 = vsel %vm320, %v45, 0
    %v331 = vsel %vm320, %v46, 0
    %333 = vmatpush.msra.mxu0 0.0
    %334 = vmatpush.msra.mxu0 0.0
    %335 = vmatpush.msra.mxu0 0.0
    %336 = vmatpush.msra.mxu0 0.0
    %337 = vmatpush.msra.mxu0 0.0
    %338 = vmatpush.msra.mxu0 0.0
    %339 = vmatpush.msra.mxu0 0.0
    %340 = vmatpush.msra.mxu0 0.0
    %341 = vmatpush.msra.mxu0 0.0
    %342 = vmatpush.msra.mxu0 0.0
    %343 = vmatpush.msra.mxu0 0.0
    %344 = vmatpush.msra.mxu0 0.0
    %345 = vmatpush.msra.mxu0 %v299
    %346 = vmatpush.msra.mxu0 %v298
    %347 = vmatpush.msra.mxu0 %v297
    %348 = vmatpush.msra.mxu0 %v296
    %349 = vmatmul.f32.gmra.mxu0 %v322
    %v350 = vpop.f32.mrf.mxu0
    %v351 = vadd.f32 %v303, %v350
    %352 = vmatmul.f32.gmra.mxu0 %v325
    %v353 = vpop.f32.mrf.mxu0
    %v354 = vadd.f32 %v308, %v353
    %355 = vmatmul.f32.gmra.mxu0 %v328
    %v356 = vpop.f32.mrf.mxu0
    %v357 = vadd.f32 %v313, %v356
    %358 = vmatmul.f32.gmra.mxu0 %v331
    %v359 = vpop.f32.mrf.mxu0
    %v360 = vadd.f32 %v318, %v359
    %361 = vdwg.mxu0
    %v362 = vmax.f32 %v351, 0.0
    %v363 = vmax.f32 %v354, 0.0
    %v364 = vmax.f32 %v357, 0.0
    %v365 = vmax.f32 %v360, 0.0
    %367 = vset.pattern.permute.xlu0 0
    %368 = vperm.xlu0 %367, %v55
    %v369 = vpop.permute.xlu0 %368
    %372 = vset.pattern.permute.xlu0 0
    %373 = vperm.xlu0 %372, %v56
    %v374 = vpop.permute.xlu0 %373
    %377 = vset.pattern.permute.xlu0 0
    %378 = vperm.xlu0 %377, %v57
    %v379 = vpop.permute.xlu0 %378
    %382 = vset.pattern.permute.xlu0 0
    %383 = vperm.xlu0 %382, %v58
    %v384 = vpop.permute.xlu0 %383
    %v386 = vmul.f32 %v362, %v369
    %v387 = vmul.f32 %v363, %v374
    %v388 = vmul.f32 %v364, %v379
    %v389 = vmul.f32 %v365, %v384
    %v390 = vadd.f32 %v386, %v387
    %v391 = vadd.f32 %v390, %v388
    %v392 = vadd.f32 %v391, %v389
    %v393 = vrot.slane %v392, 4
    %v394 = vadd.f32 %v392, %v393
    %v395 = vrot.slane %v394, 2
    %v396 = vadd.f32 %v394, %v395
    %v397 = vrot.slane %v396, 1
    %v398 = vadd.f32 %v396, %v397
    %400 = vset.pattern.permute.xlu0 0
    %401 = vperm.xlu0 %400, %v59
    %v402 = vpop.permute.xlu0 %401
    %v404 = vperm.slane %v402, 0
    %v405 = vadd.f32 %v398, %v404
    %406 = vst [vmem:[#allocation3] sm:$0x1] %v405
    // Predicated region
    $region38: #{tpu_custom_call.1} parent=1 // pred_check
      _
    $region39: #{tpu_custom_call.1} parent=1 // pred_check_branch
      %408 = sbr.rel (0) target = $region41
    $region40: #{tpu_custom_call.1} parent=1 // pred_region
      %410 = vsyncadd [#allocation4], 0
      %s412 = sshll.u32 [#allocation3], 4
      %s413 = int_to_ptr.vmem [resolvable:$true] %s412
      %s414 = sshll.u32 %s9, 4
      %s415 = int_to_ptr.hbm [resolvable:$true] %s414
      %417 = dma.vmem_to_hbm [thread:$0]  %s413, 16, %s415, [#allocation4]
    $region41: #{tpu_custom_call.1} parent=1 // pred_fallthru
      _
    // Predicated region
    $region42: #{tpu_custom_call.1} parent=1 // pred_check
      _
    $region43: #{tpu_custom_call.1} parent=1 // pred_check_branch
      %419 = sbr.rel (0) target = $region45
    $region44: #{tpu_custom_call.1} parent=1 // pred_region
      %421 = dma.done [#allocation4], 16
    $region45: #{tpu_custom_call.1} parent=1 // pred_fallthru
      _
    %422 = vsyncpa [#allocation4], 1

</llo_original>
